<compile_context>
chip_gen: v7x
topology: tpu7x:2x2x1
jax: 0.10.0
libtpu: 0.0.40
codegen_flags: <defaults>
</compile_context>

<pallas_src>
import jax
import jax.numpy as jnp
from jax.experimental import pallas as pl
from jax.experimental.pallas import tpu as pltpu
from functools import partial


def basic_block_kernel(x_ref, w1_ref, w2_ref, mask_ref, o_ref, stack_ref, *, H, W):
    # x_ref    : (1, C, H*W) f32   one image, channel-major, flat spatial (lane dim)
    # w1_ref   : (C, 9*C)    bf16  conv1 weights, columns ordered (kh, kw, cin)
    # w2_ref   : (C, 9*C)    bf16  conv2 weights, same ordering
    # mask_ref : (9, H*W)    f32   per-tap boundary masks (1.0 = in bounds)
    # o_ref    : (1, C, H*W) f32
    # stack_ref: VMEM (9*C, H*W) f32 scratch, reused for both convs' im2col stack
    HW = H * W
    slope = jnp.float32(0.01)

    def build_stack(img):
        # img: (C, HW) f32.  For tap (kh, kw) the contribution to output pixel
        # l = h*W + w is img[:, l + (kh-1)*W + (kw-1)] when the source pixel is
        # in bounds, else 0 (the conv's zero padding).  The shift is a lane
        # roll (XLU slot); out-of-bounds / row-wrap lanes are zeroed with one
        # VPU multiply by the precomputed mask row.
        C = img.shape[0]
        for kh in range(3):
            for kw in range(3):
                t = kh * 3 + kw
                dh, dw = kh - 1, kw - 1
                if dh == 0 and dw == 0:
                    win = img                                   # center tap: no roll, no mask
                else:
                    shift = (-(dh * W + dw)) % HW
                    rolled = pltpu.roll(img, shift, axis=1)
                    win = rolled * mask_ref[t:t + 1, :]         # (1, HW) broadcast over C
                stack_ref[t * C:(t + 1) * C, :] = win

    x_img = x_ref[0]  # (C, HW) f32; also the residual identity (kept in f32).

    # ---- conv1: one MXU matmul over all 9 taps (K = 9*C), then LeakyReLU ----
    build_stack(x_img)
    acc1 = jnp.dot(w1_ref[...], stack_ref[...].astype(jnp.bfloat16),
                   preferred_element_type=jnp.float32)          # (C, HW) f32
    out1 = jnp.maximum(acc1, slope * acc1)                      # LeakyReLU (slope < 1)

    # ---- conv2 + residual + LeakyReLU fused; single lane-dense store ----
    build_stack(out1)
    acc2 = jnp.dot(w2_ref[...], stack_ref[...].astype(jnp.bfloat16),
                   preferred_element_type=jnp.float32)          # (C, HW) f32
    res = acc2 + x_img
    o_ref[0] = jnp.maximum(res, slope * res)


def basic_block_forward(x_nchw, w1, w2):
    """x_nchw: (N, C, H, W) f32; w1: (Cout, Cin, 3, 3); w2: (Cout, Cout, 3, 3)."""
    N, Cin, H, W = x_nchw.shape
    Cout = w1.shape[0]
    assert Cin == Cout, "default BasicBlock (no downsample) needs inplanes==planes"
    HW = H * W

    # NCHW -> (N, C, H*W): free reshape (no transpose, no padded HBM copy).
    x_flat = x_nchw.reshape(N, Cin, HW)

    # (Cout, Cin, 3, 3) -> (Cout, 9*Cin), columns ordered (kh, kw, cin) to match
    # the stacked-window rows; bf16 so each conv is a single-pass MXU matmul.
    w1_2d = jnp.transpose(w1, (0, 2, 3, 1)).reshape(Cout, 9 * Cin).astype(jnp.bfloat16)
    w2_2d = jnp.transpose(w2, (0, 2, 3, 1)).reshape(Cout, 9 * Cout).astype(jnp.bfloat16)

    # Per-tap boundary masks (built on host, stay resident in VMEM): for tap
    # (kh, kw), mask[l] = 1.0 iff the source pixel of output position l is in
    # bounds.  One multiply per tap in the kernel replaces all integer
    # compare/and/select work.
    idx = jnp.arange(HW, dtype=jnp.int32)
    hh, ww = idx // W, idx % W
    mask_rows = []
    for kh in range(3):
        for kw in range(3):
            dh, dw = kh - 1, kw - 1
            valid = ((hh + dh >= 0) & (hh + dh < H) &
                     (ww + dw >= 0) & (ww + dw < W))
            mask_rows.append(valid.astype(jnp.float32))
    masks = jnp.stack(mask_rows)                                # (9, HW) f32

    out_flat = pl.pallas_call(
        partial(basic_block_kernel, H=H, W=W),
        out_shape=jax.ShapeDtypeStruct((N, Cout, HW), jnp.float32),
        grid_spec=pltpu.PrefetchScalarGridSpec(
            num_scalar_prefetch=0,
            grid=(N,),
            in_specs=[
                pl.BlockSpec((1, Cin, HW), lambda n: (n, 0, 0)),
                # constant index_maps -> weights / masks stay resident in VMEM
                pl.BlockSpec((Cout, 9 * Cin), lambda n: (0, 0)),
                pl.BlockSpec((Cout, 9 * Cout), lambda n: (0, 0)),
                pl.BlockSpec((9, HW), lambda n: (0, 0)),
            ],
            out_specs=pl.BlockSpec((1, Cout, HW), lambda n: (n, 0, 0)),
            scratch_shapes=[pltpu.VMEM((9 * Cout, HW), jnp.float32)],
        ),
        compiler_params=pltpu.CompilerParams(
            dimension_semantics=("parallel",),
            vmem_limit_bytes=48 * 1024 * 1024,
        ),
    )(x_flat, w1_2d, w2_2d, masks)

    # (N, C, H*W) -> NCHW: free reshape.
    return out_flat.reshape(N, Cout, H, W)


def reference_forward(x_nchw, w1, w2):
    """Pure-JAX reference (NCHW, like PyTorch), default matmul precision."""
    dn = jax.lax.conv_dimension_numbers(x_nchw.shape, w1.shape,
                                        ("NCHW", "OIHW", "NCHW"))
    def conv(x, w):
        return jax.lax.conv_general_dilated(
            x, w, window_strides=(1, 1), padding=((1, 1), (1, 1)),
            dimension_numbers=dn)
    def lrelu(v):
        return jnp.where(v > 0, v, 0.01 * v)
    out = lrelu(conv(x_nchw, w1))
    out = conv(out, w2) + x_nchw
    return lrelu(out)


if __name__ == "__main__":
    key = jax.random.PRNGKey(0)
    N, C, H, W = 2, 4, 16, 16   # inplanes = planes = 4
    k_x, k_w1, k_w2 = jax.random.split(key, 3)

    x = jax.random.normal(k_x, (N, C, H, W), dtype=jnp.float32)
    # Deterministic Kaiming-like init, shapes match nn.Conv2d(C, C, 3, bias=False)
    fan_in = C * 3 * 3
    std = (2.0 / fan_in) ** 0.5
    w1 = std * jax.random.normal(k_w1, (C, C, 3, 3), dtype=jnp.float32)
    w2 = std * jax.random.normal(k_w2, (C, C, 3, 3), dtype=jnp.float32)

    out = basic_block_forward(x, w1, w2)
    out = jax.block_until_ready(out)

    ref = jax.block_until_ready(reference_forward(x, w1, w2))
    assert out.shape == (N, C, H, W)
    # bf16 MXU operands (vs. f32 reference) loosen agreement to ~1e-2 scale.
    assert jnp.allclose(out, ref, atol=5e-2, rtol=5e-2), "mismatch vs reference"

    print("KERNEL_OK")
</pallas_src>

<mosaic_0001>
module attributes {stable_mosaic.version = 11 : i64} {
  func.func @basic_block_kernel(%arg0: i32, %arg1: memref<1x4x256xf32, #tpu.memory_space<vmem>>, %arg2: memref<4x36xbf16, #tpu.memory_space<vmem>>, %arg3: memref<4x36xbf16, #tpu.memory_space<vmem>>, %arg4: memref<9x256xf32, #tpu.memory_space<vmem>>, %arg5: memref<1x4x256xf32, #tpu.memory_space<vmem>>, %arg6: memref<36x256xf32, #tpu.memory_space<vmem>>) attributes {dimension_semantics = [#tpu.dimension_semantics<parallel>], iteration_bounds = array<i64: 2>, scalar_prefetch = 0 : i64, scratch_operands = 1 : i64, tpu.core_type = #tpu.core_type<tc>, window_params = [{transform_indices = @transform_0, window_bounds = array<i64: 1, 4, 256>}, {pipeline_mode = #tpu.pipeline_mode<synchronous>, transform_indices = @transform_1, window_bounds = array<i64: 4, 36>}, {pipeline_mode = #tpu.pipeline_mode<synchronous>, transform_indices = @transform_2, window_bounds = array<i64: 4, 36>}, {pipeline_mode = #tpu.pipeline_mode<synchronous>, transform_indices = @transform_3, window_bounds = array<i64: 9, 256>}, {transform_indices = @transform_4, window_bounds = array<i64: 1, 4, 256>}]} {
    %c0 = arith.constant 0 : index
    %c0_0 = arith.constant 0 : index
    %c0_1 = arith.constant 0 : index
    %0 = vector.load %arg1[%c0, %c0_0, %c0_1] : memref<1x4x256xf32, #tpu.memory_space<vmem>>, vector<1x4x256xf32>
    %1 = vector.shape_cast %0 : vector<1x4x256xf32> to vector<4x256xf32>
    %c17_i32 = arith.constant 17 : i32
    %2 = tpu.dynamic_rotate %1 by %c17_i32 dim 1 : vector<4x256xf32>, i32 -> vector<4x256xf32>
    %c0_2 = arith.constant 0 : index
    %c0_3 = arith.constant 0 : index
    %3 = vector.load %arg4[%c0_2, %c0_3] : memref<9x256xf32, #tpu.memory_space<vmem>>, vector<1x256xf32>
    %4 = vector.broadcast %3 : vector<1x256xf32> to vector<4x256xf32>
    %5 = arith.mulf %2, %4 : vector<4x256xf32>
    %c0_4 = arith.constant 0 : index
    %c0_5 = arith.constant 0 : index
    %6 = vector.load %arg6[%c0_4, %c0_5] : memref<36x256xf32, #tpu.memory_space<vmem>>, vector<4x256xf32>
    tpu.vector_store %arg6[%c0_4, %c0_5], %5 {strides = array<i32>} : memref<36x256xf32, #tpu.memory_space<vmem>>, vector<4x256xf32>,
    %c16_i32 = arith.constant 16 : i32
    %7 = tpu.dynamic_rotate %1 by %c16_i32 dim 1 : vector<4x256xf32>, i32 -> vector<4x256xf32>
    %c1 = arith.constant 1 : index
    %c0_6 = arith.constant 0 : index
    %8 = vector.load %arg4[%c1, %c0_6] : memref<9x256xf32, #tpu.memory_space<vmem>>, vector<1x256xf32>
    %9 = vector.broadcast %8 : vector<1x256xf32> to vector<4x256xf32>
    %10 = arith.mulf %7, %9 : vector<4x256xf32>
    %c4 = arith.constant 4 : index
    %c0_7 = arith.constant 0 : index
    %11 = vector.load %arg6[%c4, %c0_7] : memref<36x256xf32, #tpu.memory_space<vmem>>, vector<4x256xf32>
    tpu.vector_store %arg6[%c4, %c0_7], %10 {strides = array<i32>} : memref<36x256xf32, #tpu.memory_space<vmem>>, vector<4x256xf32>,
    %c15_i32 = arith.constant 15 : i32
    %12 = tpu.dynamic_rotate %1 by %c15_i32 dim 1 : vector<4x256xf32>, i32 -> vector<4x256xf32>
    %c2 = arith.constant 2 : index
    %c0_8 = arith.constant 0 : index
    %13 = vector.load %arg4[%c2, %c0_8] : memref<9x256xf32, #tpu.memory_space<vmem>>, vector<1x256xf32>
    %14 = vector.broadcast %13 : vector<1x256xf32> to vector<4x256xf32>
    %15 = arith.mulf %12, %14 : vector<4x256xf32>
    %c8 = arith.constant 8 : index
    %c0_9 = arith.constant 0 : index
    %16 = vector.load %arg6[%c8, %c0_9] : memref<36x256xf32, #tpu.memory_space<vmem>>, vector<4x256xf32>
    tpu.vector_store %arg6[%c8, %c0_9], %15 {strides = array<i32>} : memref<36x256xf32, #tpu.memory_space<vmem>>, vector<4x256xf32>,
    %c1_i32 = arith.constant 1 : i32
    %17 = tpu.dynamic_rotate %1 by %c1_i32 dim 1 : vector<4x256xf32>, i32 -> vector<4x256xf32>
    %c3 = arith.constant 3 : index
    %c0_10 = arith.constant 0 : index
    %18 = vector.load %arg4[%c3, %c0_10] : memref<9x256xf32, #tpu.memory_space<vmem>>, vector<1x256xf32>
    %19 = vector.broadcast %18 : vector<1x256xf32> to vector<4x256xf32>
    %20 = arith.mulf %17, %19 : vector<4x256xf32>
    %c12 = arith.constant 12 : index
    %c0_11 = arith.constant 0 : index
    %21 = vector.load %arg6[%c12, %c0_11] : memref<36x256xf32, #tpu.memory_space<vmem>>, vector<4x256xf32>
    tpu.vector_store %arg6[%c12, %c0_11], %20 {strides = array<i32>} : memref<36x256xf32, #tpu.memory_space<vmem>>, vector<4x256xf32>,
    %c16 = arith.constant 16 : index
    %c0_12 = arith.constant 0 : index
    %22 = vector.load %arg6[%c16, %c0_12] : memref<36x256xf32, #tpu.memory_space<vmem>>, vector<4x256xf32>
    tpu.vector_store %arg6[%c16, %c0_12], %1 {strides = array<i32>} : memref<36x256xf32, #tpu.memory_space<vmem>>, vector<4x256xf32>,
    %c255_i32 = arith.constant 255 : i32
    %23 = tpu.dynamic_rotate %1 by %c255_i32 dim 1 : vector<4x256xf32>, i32 -> vector<4x256xf32>
    %c5 = arith.constant 5 : index
    %c0_13 = arith.constant 0 : index
    %24 = vector.load %arg4[%c5, %c0_13] : memref<9x256xf32, #tpu.memory_space<vmem>>, vector<1x256xf32>
    %25 = vector.broadcast %24 : vector<1x256xf32> to vector<4x256xf32>
    %26 = arith.mulf %23, %25 : vector<4x256xf32>
    %c20 = arith.constant 20 : index
    %c0_14 = arith.constant 0 : index
    %27 = vector.load %arg6[%c20, %c0_14] : memref<36x256xf32, #tpu.memory_space<vmem>>, vector<4x256xf32>
    tpu.vector_store %arg6[%c20, %c0_14], %26 {strides = array<i32>} : memref<36x256xf32, #tpu.memory_space<vmem>>, vector<4x256xf32>,
    %c241_i32 = arith.constant 241 : i32
    %28 = tpu.dynamic_rotate %1 by %c241_i32 dim 1 : vector<4x256xf32>, i32 -> vector<4x256xf32>
    %c6 = arith.constant 6 : index
    %c0_15 = arith.constant 0 : index
    %29 = vector.load %arg4[%c6, %c0_15] : memref<9x256xf32, #tpu.memory_space<vmem>>, vector<1x256xf32>
    %30 = vector.broadcast %29 : vector<1x256xf32> to vector<4x256xf32>
    %31 = arith.mulf %28, %30 : vector<4x256xf32>
    %c24 = arith.constant 24 : index
    %c0_16 = arith.constant 0 : index
    %32 = vector.load %arg6[%c24, %c0_16] : memref<36x256xf32, #tpu.memory_space<vmem>>, vector<4x256xf32>
    tpu.vector_store %arg6[%c24, %c0_16], %31 {strides = array<i32>} : memref<36x256xf32, #tpu.memory_space<vmem>>, vector<4x256xf32>,
    %c240_i32 = arith.constant 240 : i32
    %33 = tpu.dynamic_rotate %1 by %c240_i32 dim 1 : vector<4x256xf32>, i32 -> vector<4x256xf32>
    %c7 = arith.constant 7 : index
    %c0_17 = arith.constant 0 : index
    %34 = vector.load %arg4[%c7, %c0_17] : memref<9x256xf32, #tpu.memory_space<vmem>>, vector<1x256xf32>
    %35 = vector.broadcast %34 : vector<1x256xf32> to vector<4x256xf32>
    %36 = arith.mulf %33, %35 : vector<4x256xf32>
    %c28 = arith.constant 28 : index
    %c0_18 = arith.constant 0 : index
    %37 = vector.load %arg6[%c28, %c0_18] : memref<36x256xf32, #tpu.memory_space<vmem>>, vector<4x256xf32>
    tpu.vector_store %arg6[%c28, %c0_18], %36 {strides = array<i32>} : memref<36x256xf32, #tpu.memory_space<vmem>>, vector<4x256xf32>,
    %c239_i32 = arith.constant 239 : i32
    %38 = tpu.dynamic_rotate %1 by %c239_i32 dim 1 : vector<4x256xf32>, i32 -> vector<4x256xf32>
    %c8_19 = arith.constant 8 : index
    %c0_20 = arith.constant 0 : index
    %39 = vector.load %arg4[%c8_19, %c0_20] : memref<9x256xf32, #tpu.memory_space<vmem>>, vector<1x256xf32>
    %40 = vector.broadcast %39 : vector<1x256xf32> to vector<4x256xf32>
    %41 = arith.mulf %38, %40 : vector<4x256xf32>
    %c32 = arith.constant 32 : index
    %c0_21 = arith.constant 0 : index
    %42 = vector.load %arg6[%c32, %c0_21] : memref<36x256xf32, #tpu.memory_space<vmem>>, vector<4x256xf32>
    tpu.vector_store %arg6[%c32, %c0_21], %41 {strides = array<i32>} : memref<36x256xf32, #tpu.memory_space<vmem>>, vector<4x256xf32>,
    %c0_22 = arith.constant 0 : index
    %c0_23 = arith.constant 0 : index
    %43 = vector.load %arg2[%c0_22, %c0_23] : memref<4x36xbf16, #tpu.memory_space<vmem>>, vector<4x36xbf16>
    %c0_24 = arith.constant 0 : index
    %c0_25 = arith.constant 0 : index
    %44 = vector.load %arg6[%c0_24, %c0_25] : memref<36x256xf32, #tpu.memory_space<vmem>>, vector<36x256xf32>
    %45 = arith.truncf %44 : vector<36x256xf32> to vector<36x256xbf16>
    %cst = arith.constant dense<0.000000e+00> : vector<4x256xf32>
    %46 = tpu.matmul %43, %45, %cst {dimension_numbers = #tpu.dot_dimension_numbers<[1], [0], [0], [1], [0, 0, 1, 1], [], []>} : vector<4x36xbf16>, vector<36x256xbf16>, vector<4x256xf32> -> vector<4x256xf32>
    %cst_26 = arith.constant 0.00999999977 : f32
    %47 = vector.broadcast %cst_26 : f32 to vector<4x256xf32>
    %48 = arith.mulf %47, %46 : vector<4x256xf32>
    %49 = arith.maximumf %46, %48 : vector<4x256xf32>
    %c17_i32_27 = arith.constant 17 : i32
    %50 = tpu.dynamic_rotate %49 by %c17_i32_27 dim 1 : vector<4x256xf32>, i32 -> vector<4x256xf32>
    %c0_28 = arith.constant 0 : index
    %c0_29 = arith.constant 0 : index
    %51 = vector.load %arg4[%c0_28, %c0_29] : memref<9x256xf32, #tpu.memory_space<vmem>>, vector<1x256xf32>
    %52 = vector.broadcast %51 : vector<1x256xf32> to vector<4x256xf32>
    %53 = arith.mulf %50, %52 : vector<4x256xf32>
    %c0_30 = arith.constant 0 : index
    %c0_31 = arith.constant 0 : index
    %54 = vector.load %arg6[%c0_30, %c0_31] : memref<36x256xf32, #tpu.memory_space<vmem>>, vector<4x256xf32>
    tpu.vector_store %arg6[%c0_30, %c0_31], %53 {strides = array<i32>} : memref<36x256xf32, #tpu.memory_space<vmem>>, vector<4x256xf32>,
    %c16_i32_32 = arith.constant 16 : i32
    %55 = tpu.dynamic_rotate %49 by %c16_i32_32 dim 1 : vector<4x256xf32>, i32 -> vector<4x256xf32>
    %c1_33 = arith.constant 1 : index
    %c0_34 = arith.constant 0 : index
    %56 = vector.load %arg4[%c1_33, %c0_34] : memref<9x256xf32, #tpu.memory_space<vmem>>, vector<1x256xf32>
    %57 = vector.broadcast %56 : vector<1x256xf32> to vector<4x256xf32>
    %58 = arith.mulf %55, %57 : vector<4x256xf32>
    %c4_35 = arith.constant 4 : index
    %c0_36 = arith.constant 0 : index
    %59 = vector.load %arg6[%c4_35, %c0_36] : memref<36x256xf32, #tpu.memory_space<vmem>>, vector<4x256xf32>
    tpu.vector_store %arg6[%c4_35, %c0_36], %58 {strides = array<i32>} : memref<36x256xf32, #tpu.memory_space<vmem>>, vector<4x256xf32>,
    %c15_i32_37 = arith.constant 15 : i32
    %60 = tpu.dynamic_rotate %49 by %c15_i32_37 dim 1 : vector<4x256xf32>, i32 -> vector<4x256xf32>
    %c2_38 = arith.constant 2 : index
    %c0_39 = arith.constant 0 : index
    %61 = vector.load %arg4[%c2_38, %c0_39] : memref<9x256xf32, #tpu.memory_space<vmem>>, vector<1x256xf32>
    %62 = vector.broadcast %61 : vector<1x256xf32> to vector<4x256xf32>
    %63 = arith.mulf %60, %62 : vector<4x256xf32>
    %c8_40 = arith.constant 8 : index
    %c0_41 = arith.constant 0 : index
    %64 = vector.load %arg6[%c8_40, %c0_41] : memref<36x256xf32, #tpu.memory_space<vmem>>, vector<4x256xf32>
    tpu.vector_store %arg6[%c8_40, %c0_41], %63 {strides = array<i32>} : memref<36x256xf32, #tpu.memory_space<vmem>>, vector<4x256xf32>,
    %c1_i32_42 = arith.constant 1 : i32
    %65 = tpu.dynamic_rotate %49 by %c1_i32_42 dim 1 : vector<4x256xf32>, i32 -> vector<4x256xf32>
    %c3_43 = arith.constant 3 : index
    %c0_44 = arith.constant 0 : index
    %66 = vector.load %arg4[%c3_43, %c0_44] : memref<9x256xf32, #tpu.memory_space<vmem>>, vector<1x256xf32>
    %67 = vector.broadcast %66 : vector<1x256xf32> to vector<4x256xf32>
    %68 = arith.mulf %65, %67 : vector<4x256xf32>
    %c12_45 = arith.constant 12 : index
    %c0_46 = arith.constant 0 : index
    %69 = vector.load %arg6[%c12_45, %c0_46] : memref<36x256xf32, #tpu.memory_space<vmem>>, vector<4x256xf32>
    tpu.vector_store %arg6[%c12_45, %c0_46], %68 {strides = array<i32>} : memref<36x256xf32, #tpu.memory_space<vmem>>, vector<4x256xf32>,
    %c16_47 = arith.constant 16 : index
    %c0_48 = arith.constant 0 : index
    %70 = vector.load %arg6[%c16_47, %c0_48] : memref<36x256xf32, #tpu.memory_space<vmem>>, vector<4x256xf32>
    tpu.vector_store %arg6[%c16_47, %c0_48], %49 {strides = array<i32>} : memref<36x256xf32, #tpu.memory_space<vmem>>, vector<4x256xf32>,
    %c255_i32_49 = arith.constant 255 : i32
    %71 = tpu.dynamic_rotate %49 by %c255_i32_49 dim 1 : vector<4x256xf32>, i32 -> vector<4x256xf32>
    %c5_50 = arith.constant 5 : index
    %c0_51 = arith.constant 0 : index
    %72 = vector.load %arg4[%c5_50, %c0_51] : memref<9x256xf32, #tpu.memory_space<vmem>>, vector<1x256xf32>
    %73 = vector.broadcast %72 : vector<1x256xf32> to vector<4x256xf32>
    %74 = arith.mulf %71, %73 : vector<4x256xf32>
    %c20_52 = arith.constant 20 : index
    %c0_53 = arith.constant 0 : index
    %75 = vector.load %arg6[%c20_52, %c0_53] : memref<36x256xf32, #tpu.memory_space<vmem>>, vector<4x256xf32>
    tpu.vector_store %arg6[%c20_52, %c0_53], %74 {strides = array<i32>} : memref<36x256xf32, #tpu.memory_space<vmem>>, vector<4x256xf32>,
    %c241_i32_54 = arith.constant 241 : i32
    %76 = tpu.dynamic_rotate %49 by %c241_i32_54 dim 1 : vector<4x256xf32>, i32 -> vector<4x256xf32>
    %c6_55 = arith.constant 6 : index
    %c0_56 = arith.constant 0 : index
    %77 = vector.load %arg4[%c6_55, %c0_56] : memref<9x256xf32, #tpu.memory_space<vmem>>, vector<1x256xf32>
    %78 = vector.broadcast %77 : vector<1x256xf32> to vector<4x256xf32>
    %79 = arith.mulf %76, %78 : vector<4x256xf32>
    %c24_57 = arith.constant 24 : index
    %c0_58 = arith.constant 0 : index
    %80 = vector.load %arg6[%c24_57, %c0_58] : memref<36x256xf32, #tpu.memory_space<vmem>>, vector<4x256xf32>
    tpu.vector_store %arg6[%c24_57, %c0_58], %79 {strides = array<i32>} : memref<36x256xf32, #tpu.memory_space<vmem>>, vector<4x256xf32>,
    %c240_i32_59 = arith.constant 240 : i32
    %81 = tpu.dynamic_rotate %49 by %c240_i32_59 dim 1 : vector<4x256xf32>, i32 -> vector<4x256xf32>
    %c7_60 = arith.constant 7 : index
    %c0_61 = arith.constant 0 : index
    %82 = vector.load %arg4[%c7_60, %c0_61] : memref<9x256xf32, #tpu.memory_space<vmem>>, vector<1x256xf32>
    %83 = vector.broadcast %82 : vector<1x256xf32> to vector<4x256xf32>
    %84 = arith.mulf %81, %83 : vector<4x256xf32>
    %c28_62 = arith.constant 28 : index
    %c0_63 = arith.constant 0 : index
    %85 = vector.load %arg6[%c28_62, %c0_63] : memref<36x256xf32, #tpu.memory_space<vmem>>, vector<4x256xf32>
    tpu.vector_store %arg6[%c28_62, %c0_63], %84 {strides = array<i32>} : memref<36x256xf32, #tpu.memory_space<vmem>>, vector<4x256xf32>,
    %c239_i32_64 = arith.constant 239 : i32
    %86 = tpu.dynamic_rotate %49 by %c239_i32_64 dim 1 : vector<4x256xf32>, i32 -> vector<4x256xf32>
    %c8_65 = arith.constant 8 : index
    %c0_66 = arith.constant 0 : index
    %87 = vector.load %arg4[%c8_65, %c0_66] : memref<9x256xf32, #tpu.memory_space<vmem>>, vector<1x256xf32>
    %88 = vector.broadcast %87 : vector<1x256xf32> to vector<4x256xf32>
    %89 = arith.mulf %86, %88 : vector<4x256xf32>
    %c32_67 = arith.constant 32 : index
    %c0_68 = arith.constant 0 : index
    %90 = vector.load %arg6[%c32_67, %c0_68] : memref<36x256xf32, #tpu.memory_space<vmem>>, vector<4x256xf32>
    tpu.vector_store %arg6[%c32_67, %c0_68], %89 {strides = array<i32>} : memref<36x256xf32, #tpu.memory_space<vmem>>, vector<4x256xf32>,
    %c0_69 = arith.constant 0 : index
    %c0_70 = arith.constant 0 : index
    %91 = vector.load %arg3[%c0_69, %c0_70] : memref<4x36xbf16, #tpu.memory_space<vmem>>, vector<4x36xbf16>
    %c0_71 = arith.constant 0 : index
    %c0_72 = arith.constant 0 : index
    %92 = vector.load %arg6[%c0_71, %c0_72] : memref<36x256xf32, #tpu.memory_space<vmem>>, vector<36x256xf32>
    %93 = arith.truncf %92 : vector<36x256xf32> to vector<36x256xbf16>
    %cst_73 = arith.constant dense<0.000000e+00> : vector<4x256xf32>
    %94 = tpu.matmul %91, %93, %cst_73 {dimension_numbers = #tpu.dot_dimension_numbers<[1], [0], [0], [1], [0, 0, 1, 1], [], []>} : vector<4x36xbf16>, vector<36x256xbf16>, vector<4x256xf32> -> vector<4x256xf32>
    %95 = arith.addf %94, %1 : vector<4x256xf32>
    %cst_74 = arith.constant 0.00999999977 : f32
    %96 = vector.broadcast %cst_74 : f32 to vector<4x256xf32>
    %97 = arith.mulf %96, %95 : vector<4x256xf32>
    %98 = arith.maximumf %95, %97 : vector<4x256xf32>
    %c0_75 = arith.constant 0 : index
    %c0_76 = arith.constant 0 : index
    %c0_77 = arith.constant 0 : index
    %99 = vector.load %arg5[%c0_75, %c0_76, %c0_77] : memref<1x4x256xf32, #tpu.memory_space<vmem>>, vector<1x4x256xf32>
    %100 = vector.shape_cast %99 : vector<1x4x256xf32> to vector<4x256xf32>
    %101 = vector.shape_cast %98 : vector<4x256xf32> to vector<1x4x256xf32>
    tpu.vector_store %arg5[%c0_75, %c0_76, %c0_77], %101 {strides = array<i32>} : memref<1x4x256xf32, #tpu.memory_space<vmem>>, vector<1x4x256xf32>,
    return
  }
  func.func @transform_0(%arg0: i32) -> (i32, i32, i32) {
    %c0_i32 = arith.constant 0 : i32
    %c0_i32_0 = arith.constant 0 : i32
    %c0_i32_1 = arith.constant 0 : i32
    return %arg0, %c0_i32, %c0_i32_0 : i32, i32, i32
  }
  func.func @transform_1(%arg0: i32) -> (i32, i32) {
    %c0_i32 = arith.constant 0 : i32
    %c0_i32_0 = arith.constant 0 : i32
    %c0_i32_1 = arith.constant 0 : i32
    return %c0_i32, %c0_i32_0 : i32, i32
  }
  func.func @transform_2(%arg0: i32) -> (i32, i32) {
    %c0_i32 = arith.constant 0 : i32
    %c0_i32_0 = arith.constant 0 : i32
    %c0_i32_1 = arith.constant 0 : i32
    return %c0_i32, %c0_i32_0 : i32, i32
  }
  func.func @transform_3(%arg0: i32) -> (i32, i32) {
    %c0_i32 = arith.constant 0 : i32
    %c0_i32_0 = arith.constant 0 : i32
    %c0_i32_1 = arith.constant 0 : i32
    return %c0_i32, %c0_i32_0 : i32, i32
  }
  func.func @transform_4(%arg0: i32) -> (i32, i32, i32) {
    %c0_i32 = arith.constant 0 : i32
    %c0_i32_0 = arith.constant 0 : i32
    %c0_i32_1 = arith.constant 0 : i32
    return %arg0, %c0_i32, %c0_i32_0 : i32, i32, i32
  }
}

</mosaic_0001>

<llo_original>
// kernel: tpu_custom_call.1
$region0: #{tpu_custom_call.1}
  #allocation0 [shape = 'u32[]', space=smem, size = 0x4, offset = 0x4, fixed_abs, tag = 'smem constant byte address 0x4 - core index']
  #allocation1 [shape = 'u32[144,128]{1,0:T(1,128)}', space=vmem, size = 0x12000, scoped, tag = 'internal scratch']
  #allocation2 [shape = 'f32[36,256]{1,0:T(8,128)}', space=vmem, size = 0xa000, scoped, tag = 'scratch operand']
  %s0 = inlined_call_operand.hbm [shape: f32[2,4,256], index: 0, kind: input, shape index: {}]
  %s1 = inlined_call_operand.vmem [shape: bf16[4,36], index: 1, kind: input, shape index: {}]
  %s2 = inlined_call_operand.vmem [shape: bf16[4,36], index: 2, kind: input, shape index: {}]
  %s3 = inlined_call_operand.hbm [shape: f32[9,256], index: 3, kind: input, shape index: {}]
  %s4 = inlined_call_operand.hbm [shape: f32[2,4,256], index: 4, kind: output, shape index: {}]
  %s5 = sld [smem:[#allocation0]]
  $region57: #{tpu_custom_call.1} parent=0
    _
  %s7 = ssub.s32 1, %s5
  %s8 = scalar_select 0, %s7, %s5
  $region1: #{tpu_custom_call.1} parent=0
    #allocation3 [shape = 'u8[8192]{0}', space=vmem, size = 0x2000, scoped, tag = 'input window, operand 0']
    #allocation4 [shape = 's32[2]{0}', space=sflag, size = 0x8, scoped, tag = 'scoped memory for tpu_custom_call.1']
    #allocation5 [shape = 's32[2]{0}', space=sflag, size = 0x8, scoped, tag = 'scoped memory for tpu_custom_call.1']
    #allocation6 [shape = 'u8[16384]{0}', space=vmem, size = 0x4000, scoped, tag = 'input window, operand 3, single buffered']
    #allocation7 [shape = 's32[1]{0}', space=sflag, size = 0x4, scoped, tag = 'scoped memory for tpu_custom_call.1']
    #allocation8 [shape = 'u8[8192]{0}', space=vmem, size = 0x2000, scoped, tag = 'output window, operand 0']
    %9 = vsyncpa [#allocation4], 0
    %s10 = scalar_lea.sflag [#allocation4], 1
    %11 = vsyncpa %s10, 0
    %12 = vsyncpa [#allocation7], 0
    %13 = vsyncpa [#allocation5], 0
    %s14 = scalar_lea.sflag [#allocation5], 1
    %15 = vsyncpa %s14, 0
    loop: start=0, step=1, limit=4
    $region2: #{tpu_custom_call.1} parent=1 // loop_pre_header
      _
    $region3: #{tpu_custom_call.1} parent=1 // loop_header
      %s17 = sphi 0, %s21
      %p18 = scmp.ge.s32.totalorder %s17, 4
      %s27 = sphi 0, %s29
      %s30 = sphi 0, %s27
      %s31 = sphi 0, %s30
      %s47 = sphi 0, %s31
      %s51 = sphi 0, %s51
      %s53 = sphi 0, %s51
      %s54 = sphi 0, %s53
      %s68 = sphi 0, %s54
      %s72 = sphi 0, %s72
      %s74 = sphi 0, %s72
      %s75 = sphi 0, %s74
      %s89 = sphi 0, %s75
      %s93 = sphi 0, %s93
      %s95 = sphi 0, %s93
      %s96 = sphi 0, %s95
      %s110 = sphi 0, %s96
      %s116 = sphi 0, %s118
      %s119 = sphi 0, %s116
      %s120 = sphi 0, %s119
      %s136 = sphi 0, %s120
    $region4: #{tpu_custom_call.1} parent=1 // loop_header_branch
      %20 = sbr.rel (%p18) target = $region8
    $region5: #{tpu_custom_call.1} parent=1 // loop_body
      %s22 = ssub.s32 %s17, 1
      %s23 = ssub.s32 %s17, 2
      %s24 = sadd.s32 %s17, 1
      %s25 = ssub.s32 %s17, %s24
      %p26 = scmp.eq.s32.totalorder %s25, 0
      %s28 = sadd.s32 %s27, 1
      %s29 = scalar_select %p26, %s27, %s28
      %p32 = pneg %p26
      %p33 = scmp.eq.s32.totalorder %s17, 1
      %p34 = por %p32, %p33
      %p35 = scmp.ne.s32.totalorder %s27, %s30
      %p36 = scmp.eq.s32.totalorder %s17, 0
      %p37 = por %p35, %p36
      %p38 = scmp.ne.s32.totalorder %s27, %s30
      %p39 = scmp.eq.s32.totalorder %s22, 1
      %p40 = por %p38, %p39
      %p41 = scmp.ne.s32.totalorder %s30, %s31
      %p42 = scmp.eq.s32.totalorder %s22, 0
      %p43 = por %p41, %p42
      %p44 = scmp.ne.s32.totalorder %s30, %s31
      %p45 = scmp.eq.s32.totalorder %s23, 1
      %p46 = por %p44, %p45
      %p48 = scmp.ne.s32.totalorder %s31, %s47
      %p49 = scmp.eq.s32.totalorder %s23, 0
      %p50 = por %p48, %p49
      %s52 = sadd.s32 %s51, 1
      %p55 = scmp.eq.s32.totalorder %s17, 1
      %p56 = scmp.ne.s32.totalorder %s51, %s53
      %p57 = scmp.eq.s32.totalorder %s17, 0
      %p58 = por %p56, %p57
      %p59 = scmp.ne.s32.totalorder %s51, %s53
      %p60 = scmp.eq.s32.totalorder %s22, 1
      %p61 = por %p59, %p60
      %p62 = scmp.ne.s32.totalorder %s53, %s54
      %p63 = scmp.eq.s32.totalorder %s22, 0
      %p64 = por %p62, %p63
      %p65 = scmp.ne.s32.totalorder %s53, %s54
      %p66 = scmp.eq.s32.totalorder %s23, 1
      %p67 = por %p65, %p66
      %p69 = scmp.ne.s32.totalorder %s54, %s68
      %p70 = scmp.eq.s32.totalorder %s23, 0
      %p71 = por %p69, %p70
      %s73 = sadd.s32 %s72, 1
      %p76 = scmp.eq.s32.totalorder %s17, 1
      %p77 = scmp.ne.s32.totalorder %s72, %s74
      %p78 = scmp.eq.s32.totalorder %s17, 0
      %p79 = por %p77, %p78
      %p80 = scmp.ne.s32.totalorder %s72, %s74
      %p81 = scmp.eq.s32.totalorder %s22, 1
      %p82 = por %p80, %p81
      %p83 = scmp.ne.s32.totalorder %s74, %s75
      %p84 = scmp.eq.s32.totalorder %s22, 0
      %p85 = por %p83, %p84
      %p86 = scmp.ne.s32.totalorder %s74, %s75
      %p87 = scmp.eq.s32.totalorder %s23, 1
      %p88 = por %p86, %p87
      %p90 = scmp.ne.s32.totalorder %s75, %s89
      %p91 = scmp.eq.s32.totalorder %s23, 0
      %p92 = por %p90, %p91
      %s94 = sadd.s32 %s93, 1
      %p97 = scmp.eq.s32.totalorder %s17, 1
      %p98 = scmp.ne.s32.totalorder %s93, %s95
      %p99 = scmp.eq.s32.totalorder %s17, 0
      %p100 = por %p98, %p99
      %p101 = scmp.ne.s32.totalorder %s93, %s95
      %p102 = scmp.eq.s32.totalorder %s22, 1
      %p103 = por %p101, %p102
      %p104 = scmp.ne.s32.totalorder %s95, %s96
      %p105 = scmp.eq.s32.totalorder %s22, 0
      %p106 = por %p104, %p105
      %p107 = scmp.ne.s32.totalorder %s95, %s96
      %p108 = scmp.eq.s32.totalorder %s23, 1
      %p109 = por %p107, %p108
      %p111 = scmp.ne.s32.totalorder %s96, %s110
      %p112 = scmp.eq.s32.totalorder %s23, 0
      %p113 = por %p111, %p112
      %s114 = ssub.s32 %s17, %s24
      %p115 = scmp.eq.s32.totalorder %s114, 0
      %s117 = sadd.s32 %s116, 1
      %s118 = scalar_select %p115, %s116, %s117
      %p121 = pneg %p115
      %p122 = scmp.eq.s32.totalorder %s17, 1
      %p123 = por %p121, %p122
      %p124 = scmp.ne.s32.totalorder %s116, %s119
      %p125 = scmp.eq.s32.totalorder %s17, 0
      %p126 = por %p124, %p125
      %p127 = scmp.ne.s32.totalorder %s116, %s119
      %p128 = scmp.eq.s32.totalorder %s22, 1
      %p129 = por %p127, %p128
      %p130 = scmp.ne.s32.totalorder %s119, %s120
      %p131 = scmp.eq.s32.totalorder %s22, 0
      %p132 = por %p130, %p131
      %p133 = scmp.ne.s32.totalorder %s119, %s120
      %p134 = scmp.eq.s32.totalorder %s23, 1
      %p135 = por %p133, %p134
      %p137 = scmp.ne.s32.totalorder %s120, %s136
      %p138 = scmp.eq.s32.totalorder %s23, 0
      %p139 = por %p137, %p138
      %p140 = scmp.le.s32.totalorder 1, %s17
      %p141 = scmp.lt.s32.totalorder %s17, 3
      %p142 = pnand %p140, %p141
      %p143 = pneg %p142
      // Predicated region
      $region9: #{tpu_custom_call.1} parent=5 // pred_check
        _
      $region10: #{tpu_custom_call.1} parent=5 // pred_check_branch
        %145 = sbr.rel (%p142) target = $region12
      $region11: #{tpu_custom_call.1} parent=5 // pred_region
        %s146 = ssub.s32 %s17, 1
        // Predicated region
        $region13: #{tpu_custom_call.1} parent=11 // pred_check
          %p147 = pneg %p64
        $region14: #{tpu_custom_call.1} parent=11 // pred_check_branch
          %149 = sbr.rel (%p147) target = $region16
        $region15: #{tpu_custom_call.1} parent=11 // pred_region
          _
        $region16: #{tpu_custom_call.1} parent=11 // pred_fallthru
          _
        // Predicated region
        $region17: #{tpu_custom_call.1} parent=11 // pred_check
          %p150 = pneg %p85
        $region18: #{tpu_custom_call.1} parent=11 // pred_check_branch
          %152 = sbr.rel (%p150) target = $region20
        $region19: #{tpu_custom_call.1} parent=11 // pred_region
          _
        $region20: #{tpu_custom_call.1} parent=11 // pred_fallthru
          _
        // Predicated region
        $region21: #{tpu_custom_call.1} parent=11 // pred_check
          %p153 = pneg %p106
        $region22: #{tpu_custom_call.1} parent=11 // pred_check_branch
          %155 = sbr.rel (%p153) target = $region24
        $region23: #{tpu_custom_call.1} parent=11 // pred_region
          %s157 = ssub.s32 512, 512
          %158 = vsyncadd [#allocation7], %s157
          %s159 = sshll.u32 [#allocation6], 4
          %s160 = int_to_ptr.vmem [resolvable:$true] %s159
          %165 = dma.hbm_to_vmem [thread:$0]  %s3, 512, %s160, [#allocation7], 256, 256, 16
        $region24: #{tpu_custom_call.1} parent=11 // pred_fallthru
          _
      $region12: #{tpu_custom_call.1} parent=5 // pred_fallthru
        _
      %p166 = scmp.lt.s32.totalorder %s17, 2
      // Predicated region
      $region25: #{tpu_custom_call.1} parent=5 // pred_check
        %p167 = pneg %p166
      $region26: #{tpu_custom_call.1} parent=5 // pred_check_branch
        %169 = sbr.rel (%p167) target = $region28
      $region27: #{tpu_custom_call.1} parent=5 // pred_region
        // Predicated region
        $region29: #{tpu_custom_call.1} parent=27 // pred_check
          %p170 = pneg %p37
        $region30: #{tpu_custom_call.1} parent=27 // pred_check_branch
          %172 = sbr.rel (%p170) target = $region32
        $region31: #{tpu_custom_call.1} parent=27 // pred_region
          %s173 = sand.u32 %s27, 1
          %s174 = scalar_lea.sflag [#allocation4], %s173
          %s175 = sand.u32 %s27, 1
          %s176 = smul.addr %s175, 8
          %s177 = scalar_lea.vmem [#allocation3], %s176
          %s179 = ssub.s32 128, 128
          %180 = vsyncadd %s174, %s179
          %s181 = smul.addr %s17, 2
          %s182 = smul.addr %s181, 64
          %s183 = scalar_lea.hbm %s0, %s182
          %s185 = sshll.u32 %s177, 4
          %s186 = int_to_ptr.vmem [resolvable:$true] %s185
          %188 = dma.hbm_to_vmem [thread:$0]  %s183, 128, %s186, %s174
        $region32: #{tpu_custom_call.1} parent=27 // pred_fallthru
          _
      $region28: #{tpu_custom_call.1} parent=5 // pred_fallthru
        _
      %p189 = scmp.le.s32.totalorder 1, %s17
      %p190 = scmp.lt.s32.totalorder %s17, 3
      %p191 = pnand %p189, %p190
      %p192 = pneg %p191
      // Predicated region
      $region33: #{tpu_custom_call.1} parent=5 // pred_check
        _
      $region34: #{tpu_custom_call.1} parent=5 // pred_check_branch
        %194 = sbr.rel (%p191) target = $region36
      $region35: #{tpu_custom_call.1} parent=5 // pred_region
        %s195 = ssub.s32 %s17, 1
        %s196 = sand.u32 %s30, 1
        %s197 = scalar_lea.sflag [#allocation4], %s196
        %s198 = sand.u32 %s30, 1
        %s199 = smul.addr %s198, 8
        %s200 = scalar_lea.vmem [#allocation3], %s199
        // Predicated region
        $region37: #{tpu_custom_call.1} parent=35 // pred_check
          %p201 = pneg %p43
        $region38: #{tpu_custom_call.1} parent=35 // pred_check_branch
          %203 = sbr.rel (%p201) target = $region40
        $region39: #{tpu_custom_call.1} parent=35 // pred_region
          %204 = dma.done %s197, 128
        $region40: #{tpu_custom_call.1} parent=35 // pred_fallthru
          _
        // Predicated region
        $region41: #{tpu_custom_call.1} parent=35 // pred_check
          %p205 = pneg %p106
        $region42: #{tpu_custom_call.1} parent=35 // pred_check_branch
          %207 = sbr.rel (%p205) target = $region44
        $region43: #{tpu_custom_call.1} parent=35 // pred_region
          %208 = dma.done [#allocation7], 512
        $region44: #{tpu_custom_call.1} parent=35 // pred_fallthru
          _
        %s209 = sand.u32 %s30, 1
        %s210 = scalar_lea.sflag [#allocation4], %s209
        %s211 = sand.u32 %s30, 1
        %s212 = smul.addr %s211, 8
        %s213 = scalar_lea.vmem [#allocation3], %s212
        %p214 = pneg %p43
        %p215 = pneg %p40
        %p216 = pneg %p64
        %p217 = pneg %p61
        %p218 = pneg %p85
        %p219 = pneg %p82
        %p220 = pneg %p106
        %p221 = pneg %p103
        %p222 = pneg %p132
        %p223 = pneg %p129
        %s224 = sand.u32 %s119, 1
        %s225 = scalar_lea.sflag [#allocation5], %s224
        %s226 = sand.u32 %s119, 1
        %s227 = smul.addr %s226, 8
        %s228 = scalar_lea.vmem [#allocation8], %s227
        %v230 = vld [vmem:[%s200] sm:$0xff]
        %v232 = vcombine.high %v230, %v230
        %234 = vrot.lane.b32.xlu0 %v230, 17
        %v235 = vpop.permute.xlu0 %234
        %236 = vrot.lane.b32.xlu0 %v232, 17
        %v237 = vpop.permute.xlu0 %236
        %v238 = vlaneseq
        %v239 = vand.u32 %v238, 127
        %vm240 = vcmp.lt.s32.totalorder %v239, 17
        %v241 = vsel %vm240, %v235, %v237
        %v242 = vsel %vm240, %v237, %v235
        %v243 = vld [vmem:[#allocation6] ss:$8 sm:$0x3]
        %v245 = vlaneseq
        %v246 = vshrl.u32 %v245, 7
        %v247 = vsub.s32 0, %v246
        %v248 = vrot.slane %v243, %v247
        %v249 = vlaneseq
        %v250 = vshrl.u32 %v249, 7
        %v251 = vsub.s32 1, %v250
        %v252 = vrot.slane %v243, %v251
        %v255 = vmul.f32 %v242, %v248
        %v256 = vmul.f32 %v241, %v252
        %257 = vst [vmem:[#allocation2] sm:$0xf] %v255
        %258 = vst [vmem:[#allocation2 + $0x8] sm:$0xf] %v256
        %259 = vrot.lane.b32.xlu0 %v230, 16
        %v260 = vpop.permute.xlu0 %259
        %261 = vrot.lane.b32.xlu0 %v232, 16
        %v262 = vpop.permute.xlu0 %261
        %vm263 = vcmp.lt.s32.totalorder %v239, 16
        %v264 = vsel %vm263, %v260, %v262
        %v265 = vsel %vm263, %v262, %v260
        %s266 = scalar_lea.vmem [#allocation6], 1
        %v267 = vld [vmem:[%s266] ss:$8 sm:$0x3]
        %v269 = vlaneseq
        %v270 = vshrl.u32 %v269, 7
        %v271 = vsub.s32 0, %v270
        %v272 = vrot.slane %v267, %v271
        %v273 = vlaneseq
        %v274 = vshrl.u32 %v273, 7
        %v275 = vsub.s32 1, %v274
        %v276 = vrot.slane %v267, %v275
        %v279 = vmul.f32 %v265, %v272
        %v280 = vmul.f32 %v264, %v276
        %v283 = vrot.slane %v279, 4
        %v284 = vrot.slane %v280, 4
        %287 = vst [vmem:[#allocation2] sm:$0xf0] %v283
        %288 = vst [vmem:[#allocation2 + $0x8] sm:$0xf0] %v284
        %289 = vrot.lane.b32.xlu0 %v230, 15
        %v290 = vpop.permute.xlu0 %289
        %291 = vrot.lane.b32.xlu0 %v232, 15
        %v292 = vpop.permute.xlu0 %291
        %vm293 = vcmp.lt.s32.totalorder %v239, 15
        %v294 = vsel %vm293, %v290, %v292
        %v295 = vsel %vm293, %v292, %v290
        %s296 = scalar_lea.vmem [#allocation6], 2
        %v297 = vld [vmem:[%s296] ss:$8 sm:$0x3]
        %v299 = vlaneseq
        %v300 = vshrl.u32 %v299, 7
        %v301 = vsub.s32 0, %v300
        %v302 = vrot.slane %v297, %v301
        %v303 = vlaneseq
        %v304 = vshrl.u32 %v303, 7
        %v305 = vsub.s32 1, %v304
        %v306 = vrot.slane %v297, %v305
        %v309 = vmul.f32 %v295, %v302
        %v310 = vmul.f32 %v294, %v306
        %311 = vst [vmem:[#allocation2 + $0x10] sm:$0xf] %v309
        %312 = vst [vmem:[#allocation2 + $0x18] sm:$0xf] %v310
        %313 = vrot.lane.b32.xlu0 %v230, 1
        %v314 = vpop.permute.xlu0 %313
        %315 = vrot.lane.b32.xlu0 %v232, 1
        %v316 = vpop.permute.xlu0 %315
        %vm317 = vcmp.lt.s32.totalorder %v239, 1
        %v318 = vsel %vm317, %v314, %v316
        %v319 = vsel %vm317, %v316, %v314
        %s320 = scalar_lea.vmem [#allocation6], 3
        %v321 = vld [vmem:[%s320] ss:$8 sm:$0x3]
        %v323 = vlaneseq
        %v324 = vshrl.u32 %v323, 7
        %v325 = vsub.s32 0, %v324
        %v326 = vrot.slane %v321, %v325
        %v327 = vlaneseq
        %v328 = vshrl.u32 %v327, 7
        %v329 = vsub.s32 1, %v328
        %v330 = vrot.slane %v321, %v329
        %v333 = vmul.f32 %v319, %v326
        %v334 = vmul.f32 %v318, %v330
        %v337 = vrot.slane %v333, 4
        %v338 = vrot.slane %v334, 4
        %341 = vst [vmem:[#allocation2 + $0x10] sm:$0xf0] %v337
        %342 = vst [vmem:[#allocation2 + $0x18] sm:$0xf0] %v338
        %343 = vst [vmem:[#allocation2 + $0x20] sm:$0xf] %v230
        %344 = vst [vmem:[#allocation2 + $0x28] sm:$0xf] %v232
        %345 = vrot.lane.b32.xlu0 %v230, 127
        %v346 = vpop.permute.xlu0 %345
        %347 = vrot.lane.b32.xlu0 %v232, 127
        %v348 = vpop.permute.xlu0 %347
        %vm349 = vcmp.lt.s32.totalorder %v239, 127
        %v350 = vsel %vm349, %v346, %v348
        %v351 = vsel %vm349, %v348, %v346
        %s352 = scalar_lea.vmem [#allocation6], 5
        %v353 = vld [vmem:[%s352] ss:$8 sm:$0x3]
        %v355 = vlaneseq
        %v356 = vshrl.u32 %v355, 7
        %v357 = vsub.s32 0, %v356
        %v358 = vrot.slane %v353, %v357
        %v359 = vlaneseq
        %v360 = vshrl.u32 %v359, 7
        %v361 = vsub.s32 1, %v360
        %v362 = vrot.slane %v353, %v361
        %v365 = vmul.f32 %v350, %v358
        %v366 = vmul.f32 %v351, %v362
        %v369 = vrot.slane %v365, 4
        %v370 = vrot.slane %v366, 4
        %373 = vst [vmem:[#allocation2 + $0x20] sm:$0xf0] %v369
        %374 = vst [vmem:[#allocation2 + $0x28] sm:$0xf0] %v370
        %375 = vrot.lane.b32.xlu0 %v230, 113
        %v376 = vpop.permute.xlu0 %375
        %377 = vrot.lane.b32.xlu0 %v232, 113
        %v378 = vpop.permute.xlu0 %377
        %vm379 = vcmp.lt.s32.totalorder %v239, 113
        %v380 = vsel %vm379, %v376, %v378
        %v381 = vsel %vm379, %v378, %v376
        %s382 = scalar_lea.vmem [#allocation6], 6
        %v383 = vld [vmem:[%s382] ss:$8 sm:$0x3]
        %v385 = vlaneseq
        %v386 = vshrl.u32 %v385, 7
        %v387 = vsub.s32 0, %v386
        %v388 = vrot.slane %v383, %v387
        %v389 = vlaneseq
        %v390 = vshrl.u32 %v389, 7
        %v391 = vsub.s32 1, %v390
        %v392 = vrot.slane %v383, %v391
        %v395 = vmul.f32 %v380, %v388
        %v396 = vmul.f32 %v381, %v392
        %397 = vst [vmem:[#allocation2 + $0x30] sm:$0xf] %v395
        %398 = vst [vmem:[#allocation2 + $0x38] sm:$0xf] %v396
        %399 = vrot.lane.b32.xlu0 %v230, 112
        %v400 = vpop.permute.xlu0 %399
        %401 = vrot.lane.b32.xlu0 %v232, 112
        %v402 = vpop.permute.xlu0 %401
        %vm403 = vcmp.lt.s32.totalorder %v239, 112
        %v404 = vsel %vm403, %v400, %v402
        %v405 = vsel %vm403, %v402, %v400
        %s406 = scalar_lea.vmem [#allocation6], 7
        %v407 = vld [vmem:[%s406] ss:$8 sm:$0x3]
        %v409 = vlaneseq
        %v410 = vshrl.u32 %v409, 7
        %v411 = vsub.s32 0, %v410
        %v412 = vrot.slane %v407, %v411
        %v413 = vlaneseq
        %v414 = vshrl.u32 %v413, 7
        %v415 = vsub.s32 1, %v414
        %v416 = vrot.slane %v407, %v415
        %v419 = vmul.f32 %v404, %v412
        %v420 = vmul.f32 %v405, %v416
        %v423 = vrot.slane %v419, 4
        %v424 = vrot.slane %v420, 4
        %427 = vst [vmem:[#allocation2 + $0x30] sm:$0xf0] %v423
        %428 = vst [vmem:[#allocation2 + $0x38] sm:$0xf0] %v424
        %429 = vrot.lane.b32.xlu0 %v230, 111
        %v430 = vpop.permute.xlu0 %429
        %431 = vrot.lane.b32.xlu0 %v232, 111
        %v432 = vpop.permute.xlu0 %431
        %vm433 = vcmp.lt.s32.totalorder %v239, 111
        %v434 = vsel %vm433, %v430, %v432
        %v435 = vsel %vm433, %v432, %v430
        %s436 = scalar_lea.vmem [#allocation6], 16
        %v437 = vld [vmem:[%s436] ss:$8 sm:$0x3]
        %v439 = vlaneseq
        %v440 = vshrl.u32 %v439, 7
        %v441 = vsub.s32 0, %v440
        %v442 = vrot.slane %v437, %v441
        %v443 = vlaneseq
        %v444 = vshrl.u32 %v443, 7
        %v445 = vsub.s32 1, %v444
        %v446 = vrot.slane %v437, %v445
        %v449 = vmul.f32 %v434, %v442
        %v450 = vmul.f32 %v435, %v446
        %451 = vst [vmem:[#allocation2 + $0x40] sm:$0xf] %v449
        %452 = vst [vmem:[#allocation2 + $0x48] sm:$0xf] %v450
        %v453 = vld [vmem:[%s1] sm:$0x3]
        %v454 = vld [vmem:[#allocation2] sm:$0xff]
        %v455 = vld [vmem:[#allocation2 + $0x8] sm:$0xff]
        %v456 = vld [vmem:[#allocation2 + $0x10] sm:$0xff]
        %v457 = vld [vmem:[#allocation2 + $0x18] sm:$0xff]
        %v458 = vld [vmem:[#allocation2 + $0x20] sm:$0xff]
        %v459 = vld [vmem:[#allocation2 + $0x28] sm:$0xff]
        %v460 = vld [vmem:[#allocation2 + $0x30] sm:$0xff]
        %v461 = vld [vmem:[#allocation2 + $0x38] sm:$0xff]
        %v462 = vld [vmem:[#allocation2 + $0x40] sm:$0xf]
        %v463 = vld [vmem:[#allocation2 + $0x48] sm:$0xf]
        %v464 = vpack.c.bf16 %v456, %v454
        %v465 = vpack.c.bf16 %v457, %v455
        %v466 = vpack.c.bf16 %v460, %v458
        %v467 = vpack.c.bf16 %v461, %v459
        %v468 = vpack.c.bf16 %v462, %v462
        %v469 = vpack.c.bf16 %v463, %v463
        %vm470 = vcmask 293888
        %v472 = vsel %vm470, %v453, 0
        %vm474 = vcmask 1041408
        %v476 = vsel %vm474, %v468, 0
        %v479 = vsel %vm474, %v469, 0
        %481 = vmatprep.subr.bf16.mxu0 %v465
        %482 = vmatpush1.bf16.msra.mxu0 %v464
        %483 = vmatprep.subr.bf16.mxu0 %v467
        %484 = vmatpush1.bf16.msra.mxu0 %v466
        %485 = vmatprep.subr.bf16.mxu0 %v479
        %486 = vmatpush1.bf16.msra.mxu0 %v476
        %487 = vmatprep.subr.bf16.mxu0 0
        %488 = vmatpush1.bf16.msra.mxu0 0
        %489 = vmatprep.subr.bf16.mxu0 0
        %490 = vmatpush1.bf16.msra.mxu0 0
        %491 = vmatprep.subr.bf16.mxu0 0
        %492 = vmatpush1.bf16.msra.mxu0 0
        %493 = vmatprep.subr.bf16.mxu0 0
        %494 = vmatpush1.bf16.msra.mxu0 0
        %495 = vmatprep.subr.bf16.mxu0 0
        %496 = vmatpush1.bf16.msra.mxu0 0
        %497 = vmatprep.subr.bf16.mxu0 0
        %498 = vmatpush1.bf16.msra.mxu0 0
        %499 = vmatprep.subr.bf16.mxu0 0
        %500 = vmatpush1.bf16.msra.mxu0 0
        %501 = vmatprep.subr.bf16.mxu0 0
        %502 = vmatpush1.bf16.msra.mxu0 0
        %503 = vmatprep.subr.bf16.mxu0 0
        %504 = vmatpush1.bf16.msra.mxu0 0
        %505 = vmatprep.subr.bf16.mxu0 0
        %506 = vmatpush1.bf16.msra.mxu0 0
        %507 = vmatprep.subr.bf16.mxu0 0
        %508 = vmatpush1.bf16.msra.mxu0 0
        %509 = vmatprep.subr.bf16.mxu0 0
        %510 = vmatpush1.bf16.msra.mxu0 0
        %511 = vmatprep.subr.bf16.mxu0 0
        %512 = vmatpush1.bf16.msra.mxu0 0
        %513 = vmatprep.mubr.bf16.mxu0 0
        %514 = vmatmul.mubr.bf16.gmra.mrb[0].mxu0 %v472
        %v515 = vpop.f32.mrb[0].mxu0
        %v516 = vadd.f32 0.0, %v515
        %v517 = vpop.f32.mrb[0].mxu0
        %v518 = vadd.f32 0.0, %v517
        %v519 = vpop.f32.mrb[0].mxu0
        %v520 = vpop.f32.mrb[0].mxu0
        %521 = vdwg.mxu0
        %v522 = vmul.f32 %v516, 0.01
        %v523 = vmul.f32 %v518, 0.01
        %v524 = vmax.f32 %v516, %v522
        %v525 = vmax.f32 %v518, %v523
        %526 = vrot.lane.b32.xlu0 %v524, 17
        %v527 = vpop.permute.xlu0 %526
        %528 = vrot.lane.b32.xlu0 %v525, 17
        %v529 = vpop.permute.xlu0 %528
        %v530 = vsel %vm240, %v527, %v529
        %v531 = vsel %vm240, %v529, %v527
        %v532 = vld [vmem:[#allocation6] ss:$8 sm:$0x3]
        %v534 = vlaneseq
        %v535 = vshrl.u32 %v534, 7
        %v536 = vsub.s32 0, %v535
        %v537 = vrot.slane %v532, %v536
        %v538 = vlaneseq
        %v539 = vshrl.u32 %v538, 7
        %v540 = vsub.s32 1, %v539
        %v541 = vrot.slane %v532, %v540
        %v544 = vmul.f32 %v531, %v537
        %v545 = vmul.f32 %v530, %v541
        %546 = vst [vmem:[#allocation2] sm:$0xf] %v544
        %547 = vst [vmem:[#allocation2 + $0x8] sm:$0xf] %v545
        %548 = vrot.lane.b32.xlu0 %v524, 16
        %v549 = vpop.permute.xlu0 %548
        %550 = vrot.lane.b32.xlu0 %v525, 16
        %v551 = vpop.permute.xlu0 %550
        %v552 = vsel %vm263, %v549, %v551
        %v553 = vsel %vm263, %v551, %v549
        %v554 = vld [vmem:[%s266] ss:$8 sm:$0x3]
        %v556 = vlaneseq
        %v557 = vshrl.u32 %v556, 7
        %v558 = vsub.s32 0, %v557
        %v559 = vrot.slane %v554, %v558
        %v560 = vlaneseq
        %v561 = vshrl.u32 %v560, 7
        %v562 = vsub.s32 1, %v561
        %v563 = vrot.slane %v554, %v562
        %v566 = vmul.f32 %v553, %v559
        %v567 = vmul.f32 %v552, %v563
        %v570 = vrot.slane %v566, 4
        %v571 = vrot.slane %v567, 4
        %574 = vst [vmem:[#allocation2] sm:$0xf0] %v570
        %575 = vst [vmem:[#allocation2 + $0x8] sm:$0xf0] %v571
        %576 = vrot.lane.b32.xlu0 %v524, 15
        %v577 = vpop.permute.xlu0 %576
        %578 = vrot.lane.b32.xlu0 %v525, 15
        %v579 = vpop.permute.xlu0 %578
        %v580 = vsel %vm293, %v577, %v579
        %v581 = vsel %vm293, %v579, %v577
        %v582 = vld [vmem:[%s296] ss:$8 sm:$0x3]
        %v584 = vlaneseq
        %v585 = vshrl.u32 %v584, 7
        %v586 = vsub.s32 0, %v585
        %v587 = vrot.slane %v582, %v586
        %v588 = vlaneseq
        %v589 = vshrl.u32 %v588, 7
        %v590 = vsub.s32 1, %v589
        %v591 = vrot.slane %v582, %v590
        %v594 = vmul.f32 %v581, %v587
        %v595 = vmul.f32 %v580, %v591
        %596 = vst [vmem:[#allocation2 + $0x10] sm:$0xf] %v594
        %597 = vst [vmem:[#allocation2 + $0x18] sm:$0xf] %v595
        %598 = vrot.lane.b32.xlu0 %v524, 1
        %v599 = vpop.permute.xlu0 %598
        %600 = vrot.lane.b32.xlu0 %v525, 1
        %v601 = vpop.permute.xlu0 %600
        %v602 = vsel %vm317, %v599, %v601
        %v603 = vsel %vm317, %v601, %v599
        %v604 = vld [vmem:[%s320] ss:$8 sm:$0x3]
        %v606 = vlaneseq
        %v607 = vshrl.u32 %v606, 7
        %v608 = vsub.s32 0, %v607
        %v609 = vrot.slane %v604, %v608
        %v610 = vlaneseq
        %v611 = vshrl.u32 %v610, 7
        %v612 = vsub.s32 1, %v611
        %v613 = vrot.slane %v604, %v612
        %v616 = vmul.f32 %v603, %v609
        %v617 = vmul.f32 %v602, %v613
        %v620 = vrot.slane %v616, 4
        %v621 = vrot.slane %v617, 4
        %624 = vst [vmem:[#allocation2 + $0x10] sm:$0xf0] %v620
        %625 = vst [vmem:[#allocation2 + $0x18] sm:$0xf0] %v621
        %626 = vst [vmem:[#allocation2 + $0x20] sm:$0xf] %v524
        %627 = vst [vmem:[#allocation2 + $0x28] sm:$0xf] %v525
        %628 = vrot.lane.b32.xlu0 %v524, 127
        %v629 = vpop.permute.xlu0 %628
        %630 = vrot.lane.b32.xlu0 %v525, 127
        %v631 = vpop.permute.xlu0 %630
        %v632 = vsel %vm349, %v629, %v631
        %v633 = vsel %vm349, %v631, %v629
        %v634 = vld [vmem:[%s352] ss:$8 sm:$0x3]
        %v636 = vlaneseq
        %v637 = vshrl.u32 %v636, 7
        %v638 = vsub.s32 0, %v637
        %v639 = vrot.slane %v634, %v638
        %v640 = vlaneseq
        %v641 = vshrl.u32 %v640, 7
        %v642 = vsub.s32 1, %v641
        %v643 = vrot.slane %v634, %v642
        %v646 = vmul.f32 %v632, %v639
        %v647 = vmul.f32 %v633, %v643
        %v650 = vrot.slane %v646, 4
        %v651 = vrot.slane %v647, 4
        %654 = vst [vmem:[#allocation2 + $0x20] sm:$0xf0] %v650
        %655 = vst [vmem:[#allocation2 + $0x28] sm:$0xf0] %v651
        %656 = vrot.lane.b32.xlu0 %v524, 113
        %v657 = vpop.permute.xlu0 %656
        %658 = vrot.lane.b32.xlu0 %v525, 113
        %v659 = vpop.permute.xlu0 %658
        %v660 = vsel %vm379, %v657, %v659
        %v661 = vsel %vm379, %v659, %v657
        %v662 = vld [vmem:[%s382] ss:$8 sm:$0x3]
        %v664 = vlaneseq
        %v665 = vshrl.u32 %v664, 7
        %v666 = vsub.s32 0, %v665
        %v667 = vrot.slane %v662, %v666
        %v668 = vlaneseq
        %v669 = vshrl.u32 %v668, 7
        %v670 = vsub.s32 1, %v669
        %v671 = vrot.slane %v662, %v670
        %v674 = vmul.f32 %v660, %v667
        %v675 = vmul.f32 %v661, %v671
        %676 = vst [vmem:[#allocation2 + $0x30] sm:$0xf] %v674
        %677 = vst [vmem:[#allocation2 + $0x38] sm:$0xf] %v675
        %678 = vrot.lane.b32.xlu0 %v524, 112
        %v679 = vpop.permute.xlu0 %678
        %680 = vrot.lane.b32.xlu0 %v525, 112
        %v681 = vpop.permute.xlu0 %680
        %v682 = vsel %vm403, %v679, %v681
        %v683 = vsel %vm403, %v681, %v679
        %v684 = vld [vmem:[%s406] ss:$8 sm:$0x3]
        %v686 = vlaneseq
        %v687 = vshrl.u32 %v686, 7
        %v688 = vsub.s32 0, %v687
        %v689 = vrot.slane %v684, %v688
        %v690 = vlaneseq
        %v691 = vshrl.u32 %v690, 7
        %v692 = vsub.s32 1, %v691
        %v693 = vrot.slane %v684, %v692
        %v696 = vmul.f32 %v682, %v689
        %v697 = vmul.f32 %v683, %v693
        %v700 = vrot.slane %v696, 4
        %v701 = vrot.slane %v697, 4
        %704 = vst [vmem:[#allocation2 + $0x30] sm:$0xf0] %v700
        %705 = vst [vmem:[#allocation2 + $0x38] sm:$0xf0] %v701
        %706 = vrot.lane.b32.xlu0 %v524, 111
        %v707 = vpop.permute.xlu0 %706
        %708 = vrot.lane.b32.xlu0 %v525, 111
        %v709 = vpop.permute.xlu0 %708
        %v710 = vsel %vm433, %v707, %v709
        %v711 = vsel %vm433, %v709, %v707
        %v712 = vld [vmem:[%s436] ss:$8 sm:$0x3]
        %v714 = vlaneseq
        %v715 = vshrl.u32 %v714, 7
        %v716 = vsub.s32 0, %v715
        %v717 = vrot.slane %v712, %v716
        %v718 = vlaneseq
        %v719 = vshrl.u32 %v718, 7
        %v720 = vsub.s32 1, %v719
        %v721 = vrot.slane %v712, %v720
        %v724 = vmul.f32 %v710, %v717
        %v725 = vmul.f32 %v711, %v721
        %726 = vst [vmem:[#allocation2 + $0x40] sm:$0xf] %v724
        %727 = vst [vmem:[#allocation2 + $0x48] sm:$0xf] %v725
        %v728 = vld [vmem:[%s2] sm:$0x3]
        %v729 = vld [vmem:[#allocation2] sm:$0xff]
        %v730 = vld [vmem:[#allocation2 + $0x8] sm:$0xff]
        %v731 = vld [vmem:[#allocation2 + $0x10] sm:$0xff]
        %v732 = vld [vmem:[#allocation2 + $0x18] sm:$0xff]
        %v733 = vld [vmem:[#allocation2 + $0x20] sm:$0xff]
        %v734 = vld [vmem:[#allocation2 + $0x28] sm:$0xff]
        %v735 = vld [vmem:[#allocation2 + $0x30] sm:$0xff]
        %v736 = vld [vmem:[#allocation2 + $0x38] sm:$0xff]
        %v737 = vld [vmem:[#allocation2 + $0x40] sm:$0xf]
        %v738 = vld [vmem:[#allocation2 + $0x48] sm:$0xf]
        %v739 = vpack.c.bf16 %v731, %v729
        %v740 = vpack.c.bf16 %v732, %v730
        %v741 = vpack.c.bf16 %v735, %v733
        %v742 = vpack.c.bf16 %v736, %v734
        %v743 = vpack.c.bf16 %v737, %v737
        %v744 = vpack.c.bf16 %v738, %v738
        %v746 = vsel %vm470, %v728, 0
        %v749 = vsel %vm474, %v743, 0
        %v752 = vsel %vm474, %v744, 0
        %754 = vmatprep.subr.bf16.mxu0 %v740
        %755 = vmatpush1.bf16.msra.mxu0 %v739
        %756 = vmatprep.subr.bf16.mxu0 %v742
        %757 = vmatpush1.bf16.msra.mxu0 %v741
        %758 = vmatprep.subr.bf16.mxu0 %v752
        %759 = vmatpush1.bf16.msra.mxu0 %v749
        %760 = vmatprep.subr.bf16.mxu0 0
        %761 = vmatpush1.bf16.msra.mxu0 0
        %762 = vmatprep.subr.bf16.mxu0 0
        %763 = vmatpush1.bf16.msra.mxu0 0
        %764 = vmatprep.subr.bf16.mxu0 0
        %765 = vmatpush1.bf16.msra.mxu0 0
        %766 = vmatprep.subr.bf16.mxu0 0
        %767 = vmatpush1.bf16.msra.mxu0 0
        %768 = vmatprep.subr.bf16.mxu0 0
        %769 = vmatpush1.bf16.msra.mxu0 0
        %770 = vmatprep.subr.bf16.mxu0 0
        %771 = vmatpush1.bf16.msra.mxu0 0
        %772 = vmatprep.subr.bf16.mxu0 0
        %773 = vmatpush1.bf16.msra.mxu0 0
        %774 = vmatprep.subr.bf16.mxu0 0
        %775 = vmatpush1.bf16.msra.mxu0 0
        %776 = vmatprep.subr.bf16.mxu0 0
        %777 = vmatpush1.bf16.msra.mxu0 0
        %778 = vmatprep.subr.bf16.mxu0 0
        %779 = vmatpush1.bf16.msra.mxu0 0
        %780 = vmatprep.subr.bf16.mxu0 0
        %781 = vmatpush1.bf16.msra.mxu0 0
        %782 = vmatprep.subr.bf16.mxu0 0
        %783 = vmatpush1.bf16.msra.mxu0 0
        %784 = vmatprep.subr.bf16.mxu0 0
        %785 = vmatpush1.bf16.msra.mxu0 0
        %786 = vmatprep.mubr.bf16.mxu0 0
        %787 = vmatmul.mubr.bf16.gmra.mrb[0].mxu0 %v746
        %v788 = vpop.f32.mrb[0].mxu0
        %v789 = vadd.f32 %v230, %v788
        %v790 = vpop.f32.mrb[0].mxu0
        %v791 = vadd.f32 %v232, %v790
        %v792 = vpop.f32.mrb[0].mxu0
        %v793 = vpop.f32.mrb[0].mxu0
        %794 = vdwg.mxu0
        %v795 = vmul.f32 %v789, 0.01
        %v796 = vmul.f32 %v791, 0.01
        %v797 = vmax.f32 %v789, %v795
        %v798 = vmax.f32 %v791, %v796
        %v801 = vcombine.low %v797, %v798
        %803 = vst [vmem:[%s228] sm:$0xff] %v801
        %s804 = sand.u32 %s119, 1
        %s805 = scalar_lea.sflag [#allocation5], %s804
        %s806 = sand.u32 %s119, 1
        %s807 = smul.addr %s806, 8
        %s808 = scalar_lea.vmem [#allocation8], %s807
        // Predicated region
        $region45: #{tpu_custom_call.1} parent=35 // pred_check
          %p809 = pneg %p129
        $region46: #{tpu_custom_call.1} parent=35 // pred_check_branch
          %811 = sbr.rel (%p809) target = $region48
        $region47: #{tpu_custom_call.1} parent=35 // pred_region
          %s813 = ssub.s32 128, 128
          %814 = vsyncadd %s805, %s813
          %s815 = smul.addr %s22, 2
          %s816 = smul.addr %s815, 64
          %s817 = scalar_lea.hbm %s4, %s816
          %s819 = sshll.u32 %s808, 4
          %s820 = int_to_ptr.vmem [resolvable:$true] %s819
          %822 = dma.vmem_to_hbm [thread:$0]  %s820, 128, %s817, %s805
        $region48: #{tpu_custom_call.1} parent=35 // pred_fallthru
          _
      $region36: #{tpu_custom_call.1} parent=5 // pred_fallthru
        _
      %p823 = scmp.le.s32.totalorder 2, %s17
      // Predicated region
      $region49: #{tpu_custom_call.1} parent=5 // pred_check
        %p824 = pneg %p823
      $region50: #{tpu_custom_call.1} parent=5 // pred_check_branch
        %826 = sbr.rel (%p824) target = $region52
      $region51: #{tpu_custom_call.1} parent=5 // pred_region
        %s827 = ssub.s32 %s17, 2
        // Predicated region
        $region53: #{tpu_custom_call.1} parent=51 // pred_check
          %p828 = pneg %p135
        $region54: #{tpu_custom_call.1} parent=51 // pred_check_branch
          %830 = sbr.rel (%p828) target = $region56
        $region55: #{tpu_custom_call.1} parent=51 // pred_region
          %s831 = sand.u32 %s120, 1
          %s832 = scalar_lea.sflag [#allocation5], %s831
          %s833 = sand.u32 %s120, 1
          %s834 = smul.addr %s833, 8
          %s835 = scalar_lea.vmem [#allocation8], %s834
          %836 = dma.done %s832, 128
        $region56: #{tpu_custom_call.1} parent=51 // pred_fallthru
          _
      $region52: #{tpu_custom_call.1} parent=5 // pred_fallthru
        _
    $region6: #{tpu_custom_call.1} parent=1 // loop_footer
      %s21 = sadd.s32 1, %s17
    $region7: #{tpu_custom_call.1} parent=1 // loop_footer_branch
      %16 = sbr.rel target = $region3
    $region8: #{tpu_custom_call.1} parent=1 // loop_exit
      _
    %837 = vsyncpa [#allocation4], 1
    %s838 = scalar_lea.sflag [#allocation4], 1
    %839 = vsyncpa %s838, 1
    %840 = vsyncpa [#allocation7], 1
    %841 = vsyncpa [#allocation5], 1
    %s842 = scalar_lea.sflag [#allocation5], 1
    %843 = vsyncpa %s842, 1

</llo_original>
